<compile_context>
chip_gen: v5e
topology: v5e:2x2
jax: 0.10.0
libtpu: 0.0.40
codegen_flags: <defaults>
</compile_context>

<pallas_src>
import math

import jax
import jax.numpy as jnp
from jax.experimental import pallas as pl
from jax.experimental.pallas import tpu as pltpu


def _round_up(x, m):
    return ((x + m - 1) // m) * m


# ---------------------------------------------------------------------------
# Kernel
# ---------------------------------------------------------------------------
def _moe_kernel(g_ref, vs_ref, vt_ref, va_ref, o_ref):
    """o = V_S * softmax(g)[0] + V_T * softmax(g)[1] + V_A * softmax(g)[2].

    g_ref  : (3, tile_c)       lane-tiled gating block (column j <-> channel j % c)
    v*_ref : (tile_r, tile_c)  stream tiles
    o_ref  : (tile_r, tile_c)
    """
    g = g_ref[...].astype(jnp.float32)                       # (3, tile_c)
    m = jnp.max(g, axis=0, keepdims=True)                    # (1, tile_c)
    e = jnp.exp(g - m)                                        # (3, tile_c)  (EUP)
    # Approximate reciprocal -> EUP slot; the VALU carries the gated sum below.
    # Error is negligible for 3-way gate weights (and hidden under the DMA).
    gsm = e * pl.reciprocal(jnp.sum(e, axis=0, keepdims=True), approx=True)

    # Accumulate the gated sum in f32 on every chip generation (v5e has no bf16
    # VALU and f32 accumulation matches the PyTorch promotion semantics); cast
    # once at the store.  Kernel stays HBM-bound either way.
    out = (vs_ref[...].astype(jnp.float32) * gsm[0:1, :]
           + vt_ref[...].astype(jnp.float32) * gsm[1:2, :]
           + va_ref[...].astype(jnp.float32) * gsm[2:3, :])
    o_ref[...] = out.astype(o_ref.dtype)


# ---------------------------------------------------------------------------
# Tiling helpers
# ---------------------------------------------------------------------------
def _vmem_budget_and_limit():
    """(double-buffered block budget, vmem_limit_bytes) derived from the chip."""
    cap = 64 * 1024 * 1024                      # conservative default: v7x per-TC
    try:
        info = pltpu.get_tpu_info()
        cap_attr = getattr(info, "vmem_capacity_bytes", None)
        if cap_attr:
            cap = int(cap_attr)
    except Exception:
        pass                                    # keep conservative default
    if cap >= 96 * 1024 * 1024:                 # v5e / v6e: 128 MiB physical VMEM
        return 56 * 1024 * 1024, 100 * 1024 * 1024
    # v7x: 64 MiB physical -> ~36 MiB of buffers, ~12 MiB compiler headroom
    return 36 * 1024 * 1024, 52 * 1024 * 1024


def _pick_tiles(n_rows, c_pack, itemsize, budget):
    """Choose (tile_r, tile_c) so 4 double-buffered streams fit `budget` bytes."""
    # dtype-aware sublane multiple: f32 -> 8, bf16 -> 16, int8/fp8 -> 32
    sub = {4: 8, 2: 16, 1: 32}.get(itemsize, 8)
    bytes_per_elem = itemsize * 4 * 2            # 3 inputs + 1 output, double-buffered

    # Lane tile: keep the full packed width unless even a `sub`-row strip would
    # blow the budget (very wide c_pack); then split lanes in multiples of 128.
    tile_c = c_pack
    if c_pack % 128 == 0:
        max_c = max(((budget // (sub * bytes_per_elem)) // 128) * 128, 128)
        if max_c < c_pack:
            tile_c = max_c
            while tile_c > 128 and c_pack % tile_c != 0:
                tile_c -= 128

    # Row tile against the remaining budget.
    per_row = tile_c * bytes_per_elem
    t = max(budget // max(per_row, 1), 1)
    # Target >= 4 row steps so ("parallel", ...) semantics can shard across
    # v7x's two TensorCores even when everything fits in one block.
    target = _round_up(pl.cdiv(n_rows, 4), sub)
    t = min(t, target)
    t = max(sub, (t // sub) * sub)
    if t >= n_rows:
        return n_rows, tile_c                    # tiny input: single full-row block

    # Prefer an even number of row steps (balanced dual-TC split on v7x).
    steps = pl.cdiv(n_rows, t)
    if steps % 2 == 1:
        t2 = _round_up(pl.cdiv(n_rows, steps + 1), sub)
        if sub <= t2 <= t and pl.cdiv(n_rows, t2) % 2 == 0:
            t = t2
    return t, tile_c


# ---------------------------------------------------------------------------
# Wrapper
# ---------------------------------------------------------------------------
def mixture_of_experts(g, V_S, V_T, V_A):
    """Pallas TPU MixtureOfExperts forward.

    g   : (3, c) gating parameter
    V_* : (..., c) streams (all three must share the same shape)
    """
    assert V_S.shape == V_T.shape == V_A.shape
    c = g.shape[1]
    assert g.shape[0] == 3 and V_S.shape[-1] == c

    orig_shape = V_S.shape
    orig_dtype = V_S.dtype
    vs = V_S.reshape(-1, c)
    vt = V_T.reshape(-1, c)
    va = V_A.reshape(-1, c)
    rows = vs.shape[0]

    # Lane-dense repack: (rows, c) -> (rows_pad/k, k*c) with k*c % 128 == 0.
    # Column j of the packed layout is channel j % c, so the tiny (3, c) gating
    # matrix is tiled k times along lanes (done once here, negligible).  Rows
    # are zero-padded to a multiple of k and the pad is sliced off the output,
    # so the layout (and the dense store path) holds for arbitrary `rows`.
    if c % 128 == 0:
        k_rep = 1
    else:
        k_rep = math.lcm(c, 128) // c
    rows_pad = _round_up(max(rows, 1), k_rep)
    if rows_pad != rows:
        pad = ((0, rows_pad - rows), (0, 0))
        vs = jnp.pad(vs, pad)
        vt = jnp.pad(vt, pad)
        va = jnp.pad(va, pad)

    c_pack = k_rep * c
    n_rows = rows_pad // k_rep
    vs_p = vs.reshape(n_rows, c_pack)
    vt_p = vt.reshape(n_rows, c_pack)
    va_p = va.reshape(n_rows, c_pack)
    g_packed = jnp.tile(g, (1, k_rep)) if k_rep > 1 else g

    itemsize = jnp.dtype(orig_dtype).itemsize
    budget, vmem_limit = _vmem_budget_and_limit()
    tile_r, tile_c = _pick_tiles(n_rows, c_pack, itemsize, budget)
    grid = (pl.cdiv(n_rows, tile_r), pl.cdiv(c_pack, tile_c))
    n_steps = grid[0] * grid[1]

    cost = pl.CostEstimate(
        flops=5 * n_rows * c_pack,                            # 3 mul + 2 add / elem
        transcendentals=3 * tile_c * n_steps,                 # in-kernel gate softmax
        bytes_accessed=4 * n_rows * c_pack * itemsize + 3 * c * 4,
    )

    out = pl.pallas_call(
        _moe_kernel,
        out_shape=jax.ShapeDtypeStruct((n_rows, c_pack), orig_dtype),
        grid=grid,
        in_specs=[
            pl.BlockSpec((3, tile_c), lambda i, j: (0, j)),        # gating (resident)
            pl.BlockSpec((tile_r, tile_c), lambda i, j: (i, j)),
            pl.BlockSpec((tile_r, tile_c), lambda i, j: (i, j)),
            pl.BlockSpec((tile_r, tile_c), lambda i, j: (i, j)),
        ],
        out_specs=pl.BlockSpec((tile_r, tile_c), lambda i, j: (i, j)),
        compiler_params=pltpu.CompilerParams(
            dimension_semantics=("parallel", "parallel"),          # dual-TC on v7x
            vmem_limit_bytes=vmem_limit,
        ),
        cost_estimate=cost,
    )(g_packed, vs_p, vt_p, va_p)

    out = out.reshape(rows_pad, c)
    if rows_pad != rows:
        out = out[:rows]
    return out.reshape(orig_shape)


# ---------------------------------------------------------------------------
# Reference + smoke test
# ---------------------------------------------------------------------------
def _reference(g, V_S, V_T, V_A):
    gsm = jax.nn.softmax(g.astype(jnp.float32), axis=0)
    return (V_S.astype(jnp.float32) * gsm[0]
            + V_T.astype(jnp.float32) * gsm[1]
            + V_A.astype(jnp.float32) * gsm[2]).astype(V_S.dtype)


if __name__ == "__main__":
    key = jax.random.PRNGKey(0)
    k_g, k_s, k_t, k_a = jax.random.split(key, 4)

    # Small shapes consistent with the module: batch=2, seq=8, hidden(c)=32
    c = 32
    v_shape = (2, 8, c)

    # Deterministic xavier_uniform-style init for g (fan_in=3, fan_out=c)
    bound = math.sqrt(6.0 / (3 + c))
    g = jax.random.uniform(k_g, (3, c), jnp.float32, minval=-bound, maxval=bound)

    V_S = jax.random.normal(k_s, v_shape, jnp.float32)
    V_T = jax.random.normal(k_t, v_shape, jnp.float32)
    V_A = jax.random.normal(k_a, v_shape, jnp.float32)

    out = jax.block_until_ready(mixture_of_experts(g, V_S, V_T, V_A))
    ref = _reference(g, V_S, V_T, V_A)

    assert out.shape == v_shape and out.dtype == V_S.dtype
    # Only deviation source vs the exact reference is the EUP approximate
    # reciprocal in the in-kernel gate softmax (sub-1e-3 absolute).
    assert jnp.allclose(out, ref, atol=5e-3, rtol=5e-3), "mismatch vs reference"

    print("KERNEL_OK")
</pallas_src>

<mosaic_0001>
module attributes {stable_mosaic.version = 11 : i64} {
  func.func @_moe_kernel(%arg0: i32, %arg1: i32, %arg2: memref<3x128xf32, #tpu.memory_space<vmem>>, %arg3: memref<4x128xf32, #tpu.memory_space<vmem>>, %arg4: memref<4x128xf32, #tpu.memory_space<vmem>>, %arg5: memref<4x128xf32, #tpu.memory_space<vmem>>, %arg6: memref<4x128xf32, #tpu.memory_space<vmem>>) attributes {dimension_semantics = [#tpu.dimension_semantics<parallel>, #tpu.dimension_semantics<parallel>], iteration_bounds = array<i64: 1, 1>, scalar_prefetch = 0 : i64, scratch_operands = 0 : i64, tpu.core_type = #tpu.core_type<tc>, window_params = [{transform_indices = @transform_0, window_bounds = array<i64: 3, 128>}, {transform_indices = @transform_1, window_bounds = array<i64: 4, 128>}, {transform_indices = @transform_2, window_bounds = array<i64: 4, 128>}, {transform_indices = @transform_3, window_bounds = array<i64: 4, 128>}, {transform_indices = @transform_4, window_bounds = array<i64: 4, 128>}]} {
    %c0 = arith.constant 0 : index
    %c0_0 = arith.constant 0 : index
    %0 = vector.load %arg2[%c0, %c0_0] : memref<3x128xf32, #tpu.memory_space<vmem>>, vector<3x128xf32>
    %cst = arith.constant dense<0xFF800000> : vector<128xf32>
    %1 = vector.multi_reduction <maximumf>, %0, %cst [0] : vector<3x128xf32> to vector<128xf32>
    %2 = vector.shape_cast %1 : vector<128xf32> to vector<1x128xf32>
    %3 = vector.broadcast %2 : vector<1x128xf32> to vector<3x128xf32>
    %4 = arith.subf %0, %3 : vector<3x128xf32>
    %5 = math.exp %4 : vector<3x128xf32>
    %cst_1 = arith.constant dense<0.000000e+00> : vector<128xf32>
    %6 = vector.multi_reduction <add>, %5, %cst_1 [0] : vector<3x128xf32> to vector<128xf32>
    %7 = vector.shape_cast %6 : vector<128xf32> to vector<1x128xf32>
    %8 = tpu.reciprocal %7 {approx = true} : vector<1x128xf32> -> vector<1x128xf32>
    %9 = vector.broadcast %8 : vector<1x128xf32> to vector<3x128xf32>
    %10 = arith.mulf %5, %9 : vector<3x128xf32>
    %c0_2 = arith.constant 0 : index
    %c0_3 = arith.constant 0 : index
    %11 = vector.load %arg3[%c0_2, %c0_3] : memref<4x128xf32, #tpu.memory_space<vmem>>, vector<4x128xf32>
    %12 = vector.extract_strided_slice %10 {offsets = [0, 0], sizes = [1, 128], strides = [1, 1]} : vector<3x128xf32> to vector<1x128xf32>
    %13 = vector.broadcast %12 : vector<1x128xf32> to vector<4x128xf32>
    %14 = arith.mulf %11, %13 : vector<4x128xf32>
    %c0_4 = arith.constant 0 : index
    %c0_5 = arith.constant 0 : index
    %15 = vector.load %arg4[%c0_4, %c0_5] : memref<4x128xf32, #tpu.memory_space<vmem>>, vector<4x128xf32>
    %16 = vector.extract_strided_slice %10 {offsets = [1, 0], sizes = [1, 128], strides = [1, 1]} : vector<3x128xf32> to vector<1x128xf32>
    %17 = vector.broadcast %16 : vector<1x128xf32> to vector<4x128xf32>
    %18 = arith.mulf %15, %17 : vector<4x128xf32>
    %19 = arith.addf %14, %18 : vector<4x128xf32>
    %c0_6 = arith.constant 0 : index
    %c0_7 = arith.constant 0 : index
    %20 = vector.load %arg5[%c0_6, %c0_7] : memref<4x128xf32, #tpu.memory_space<vmem>>, vector<4x128xf32>
    %21 = vector.extract_strided_slice %10 {offsets = [2, 0], sizes = [1, 128], strides = [1, 1]} : vector<3x128xf32> to vector<1x128xf32>
    %22 = vector.broadcast %21 : vector<1x128xf32> to vector<4x128xf32>
    %23 = arith.mulf %20, %22 : vector<4x128xf32>
    %24 = arith.addf %19, %23 : vector<4x128xf32>
    %c0_8 = arith.constant 0 : index
    %c0_9 = arith.constant 0 : index
    %25 = vector.load %arg6[%c0_8, %c0_9] : memref<4x128xf32, #tpu.memory_space<vmem>>, vector<4x128xf32>
    tpu.vector_store %arg6[%c0_8, %c0_9], %24 {strides = array<i32>} : memref<4x128xf32, #tpu.memory_space<vmem>>, vector<4x128xf32>,
    return
  }
  func.func @transform_0(%arg0: i32, %arg1: i32) -> (i32, i32) {
    %c0_i32 = arith.constant 0 : i32
    %c0_i32_0 = arith.constant 0 : i32
    return %c0_i32, %arg1 : i32, i32
  }
  func.func @transform_1(%arg0: i32, %arg1: i32) -> (i32, i32) {
    %c0_i32 = arith.constant 0 : i32
    return %arg0, %arg1 : i32, i32
  }
  func.func @transform_2(%arg0: i32, %arg1: i32) -> (i32, i32) {
    %c0_i32 = arith.constant 0 : i32
    return %arg0, %arg1 : i32, i32
  }
  func.func @transform_3(%arg0: i32, %arg1: i32) -> (i32, i32) {
    %c0_i32 = arith.constant 0 : i32
    return %arg0, %arg1 : i32, i32
  }
  func.func @transform_4(%arg0: i32, %arg1: i32) -> (i32, i32) {
    %c0_i32 = arith.constant 0 : i32
    return %arg0, %arg1 : i32, i32
  }
}

</mosaic_0001>

<llo_original>
// kernel: tpu_custom_call.1
$region0: #{tpu_custom_call.1}
  #allocation0 [shape = 'u32[]', space=smem, size = 0x4, offset = 0x4, fixed_abs, tag = 'smem constant byte address 0x4 - core index']
  #allocation1 [shape = 'u32[72,128]{1,0:T(1,128)}', space=vmem, size = 0x9000, scoped, tag = 'internal scratch']
  %s0 = inlined_call_operand.hbm [shape: f32[3,128], index: 0, kind: input, shape index: {}]
  %s1 = inlined_call_operand.hbm [shape: f32[4,128], index: 1, kind: input, shape index: {}]
  %s2 = inlined_call_operand.hbm [shape: f32[4,128], index: 2, kind: input, shape index: {}]
  %s3 = inlined_call_operand.hbm [shape: f32[4,128], index: 3, kind: input, shape index: {}]
  %s4 = inlined_call_operand.hbm [shape: f32[4,128], index: 4, kind: output, shape index: {}]
  %s5 = sld [smem:[#allocation0]]
  $region42: #{tpu_custom_call.1} parent=0
    _
  %s7 = ssub.s32 1, %s5
  %s8 = scalar_select 0, %s7, %s5
  $region1: #{tpu_custom_call.1} parent=0
    #allocation2 [shape = 'u8[2048]{0}', space=vmem, size = 0x800, scoped, tag = 'input window, operand 0, single buffered']
    #allocation3 [shape = 's32[1]{0}', space=sflag, size = 0x4, scoped, tag = 'scoped memory for tpu_custom_call.1']
    #allocation4 [shape = 's32[1]{0}', space=sflag, size = 0x4, scoped, tag = 'scoped memory for tpu_custom_call.1']
    #allocation5 [shape = 'u8[2048]{0}', space=vmem, size = 0x800, scoped, tag = 'input window, operand 1, single buffered']
    #allocation6 [shape = 's32[1]{0}', space=sflag, size = 0x4, scoped, tag = 'scoped memory for tpu_custom_call.1']
    #allocation7 [shape = 'u8[2048]{0}', space=vmem, size = 0x800, scoped, tag = 'input window, operand 2, single buffered']
    #allocation8 [shape = 'u8[2048]{0}', space=vmem, size = 0x800, scoped, tag = 'input window, operand 3, single buffered']
    #allocation9 [shape = 's32[1]{0}', space=sflag, size = 0x4, scoped, tag = 'scoped memory for tpu_custom_call.1']
    #allocation10 [shape = 'u8[2048]{0}', space=vmem, size = 0x800, scoped, tag = 'output window, operand 0, single buffered']
    %9 = vsyncpa [#allocation3], 0
    %10 = vsyncpa [#allocation6], 0
    %11 = vsyncpa [#allocation9], 0
    %12 = vsyncpa [#allocation4], 0
    // Predicated region
    $region2: #{tpu_custom_call.1} parent=1 // pred_check
      _
    $region3: #{tpu_custom_call.1} parent=1 // pred_check_branch
      %14 = sbr.rel (0) target = $region5
    $region4: #{tpu_custom_call.1} parent=1 // pred_region
      %16 = vsyncadd [#allocation3], 0
      %s18 = sshll.u32 %s0, 4
      %s19 = int_to_ptr.hbm [resolvable:$true] %s18
      %s20 = sshll.u32 [#allocation2], 4
      %s21 = int_to_ptr.vmem [resolvable:$true] %s20
      %23 = dma.hbm_to_vmem [thread:$0]  %s19, 64, %s21, [#allocation3]
    $region5: #{tpu_custom_call.1} parent=1 // pred_fallthru
      _
    // Predicated region
    $region6: #{tpu_custom_call.1} parent=1 // pred_check
      _
    $region7: #{tpu_custom_call.1} parent=1 // pred_check_branch
      %25 = sbr.rel (0) target = $region9
    $region8: #{tpu_custom_call.1} parent=1 // pred_region
      %27 = vsyncadd [#allocation6], 0
      %s29 = sshll.u32 %s1, 4
      %s30 = int_to_ptr.hbm [resolvable:$true] %s29
      %s31 = sshll.u32 [#allocation5], 4
      %s32 = int_to_ptr.vmem [resolvable:$true] %s31
      %34 = dma.hbm_to_vmem [thread:$0]  %s30, 64, %s32, [#allocation6]
    $region9: #{tpu_custom_call.1} parent=1 // pred_fallthru
      _
    // Predicated region
    $region10: #{tpu_custom_call.1} parent=1 // pred_check
      _
    $region11: #{tpu_custom_call.1} parent=1 // pred_check_branch
      %36 = sbr.rel (0) target = $region13
    $region12: #{tpu_custom_call.1} parent=1 // pred_region
      %38 = vsyncadd [#allocation6], 0
      %s40 = sshll.u32 %s2, 4
      %s41 = int_to_ptr.hbm [resolvable:$true] %s40
      %s42 = sshll.u32 [#allocation7], 4
      %s43 = int_to_ptr.vmem [resolvable:$true] %s42
      %45 = dma.hbm_to_vmem [thread:$0]  %s41, 64, %s43, [#allocation6]
    $region13: #{tpu_custom_call.1} parent=1 // pred_fallthru
      _
    // Predicated region
    $region14: #{tpu_custom_call.1} parent=1 // pred_check
      _
    $region15: #{tpu_custom_call.1} parent=1 // pred_check_branch
      %47 = sbr.rel (0) target = $region17
    $region16: #{tpu_custom_call.1} parent=1 // pred_region
      %49 = vsyncadd [#allocation9], 0
      %s51 = sshll.u32 %s3, 4
      %s52 = int_to_ptr.hbm [resolvable:$true] %s51
      %s53 = sshll.u32 [#allocation8], 4
      %s54 = int_to_ptr.vmem [resolvable:$true] %s53
      %56 = dma.hbm_to_vmem [thread:$0]  %s52, 64, %s54, [#allocation9]
    $region17: #{tpu_custom_call.1} parent=1 // pred_fallthru
      _
    // Predicated region
    $region18: #{tpu_custom_call.1} parent=1 // pred_check
      _
    $region19: #{tpu_custom_call.1} parent=1 // pred_check_branch
      %58 = sbr.rel (0) target = $region21
    $region20: #{tpu_custom_call.1} parent=1 // pred_region
      %60 = dma.done [#allocation3], 64
    $region21: #{tpu_custom_call.1} parent=1 // pred_fallthru
      _
    // Predicated region
    $region22: #{tpu_custom_call.1} parent=1 // pred_check
      _
    $region23: #{tpu_custom_call.1} parent=1 // pred_check_branch
      %62 = sbr.rel (0) target = $region25
    $region24: #{tpu_custom_call.1} parent=1 // pred_region
      %64 = dma.done [#allocation6], 64
    $region25: #{tpu_custom_call.1} parent=1 // pred_fallthru
      _
    // Predicated region
    $region26: #{tpu_custom_call.1} parent=1 // pred_check
      _
    $region27: #{tpu_custom_call.1} parent=1 // pred_check_branch
      %66 = sbr.rel (0) target = $region29
    $region28: #{tpu_custom_call.1} parent=1 // pred_region
      %68 = dma.done [#allocation6], 64
    $region29: #{tpu_custom_call.1} parent=1 // pred_fallthru
      _
    // Predicated region
    $region30: #{tpu_custom_call.1} parent=1 // pred_check
      _
    $region31: #{tpu_custom_call.1} parent=1 // pred_check_branch
      %70 = sbr.rel (0) target = $region33
    $region32: #{tpu_custom_call.1} parent=1 // pred_region
      %72 = dma.done [#allocation9], 64
    $region33: #{tpu_custom_call.1} parent=1 // pred_fallthru
      _
    %v73 = vld [vmem:[#allocation2] sm:$0x7]
    %vm74 = vcmask 1042432
    %v75 = vsel %vm74, %v73, -inf
    %v76 = vrot.slane %v75, 4
    %v77 = vmax.f32 %v75, %v76
    %v78 = vrot.slane %v77, 2
    %v79 = vmax.f32 %v77, %v78
    %v80 = vrot.slane %v79, 1
    %v81 = vmax.f32 %v79, %v80
    %v82 = vsub.f32 %v73, %v81
    %v83 = vmul.f32 %v82, 1.442695
    %v84 = vpow.pop %v83
    %v85 = vsel %vm74, %v84, 0.0
    %v86 = vrot.slane %v85, 4
    %v87 = vadd.f32 %v85, %v86
    %v88 = vrot.slane %v87, 2
    %v89 = vadd.f32 %v87, %v88
    %v90 = vrot.slane %v89, 1
    %v91 = vadd.f32 %v89, %v90
    %v92 = vrcp.pop %v91
    %v93 = vmul.f32 %v84, %v92
    %v94 = vld [vmem:[#allocation5] sm:$0xf]
    %v95 = vperm.slane %v93, 0
    %v96 = vmul.f32 %v94, %v95
    %v97 = vld [vmem:[#allocation7] sm:$0xf]
    %v98 = vperm.slane %v93, 1
    %v99 = vmul.f32 %v97, %v98
    %v100 = vadd.f32 %v96, %v99
    %v101 = vld [vmem:[#allocation8] sm:$0xf]
    %v102 = vperm.slane %v93, 2
    %v103 = vmul.f32 %v101, %v102
    %v104 = vadd.f32 %v100, %v103
    %105 = vst [vmem:[#allocation10] sm:$0xf] %v104
    // Predicated region
    $region34: #{tpu_custom_call.1} parent=1 // pred_check
      _
    $region35: #{tpu_custom_call.1} parent=1 // pred_check_branch
      %107 = sbr.rel (0) target = $region37
    $region36: #{tpu_custom_call.1} parent=1 // pred_region
      %109 = vsyncadd [#allocation4], 0
      %s111 = sshll.u32 [#allocation10], 4
      %s112 = int_to_ptr.vmem [resolvable:$true] %s111
      %s113 = sshll.u32 %s4, 4
      %s114 = int_to_ptr.hbm [resolvable:$true] %s113
      %116 = dma.vmem_to_hbm [thread:$0]  %s112, 64, %s114, [#allocation4]
    $region37: #{tpu_custom_call.1} parent=1 // pred_fallthru
      _
    // Predicated region
    $region38: #{tpu_custom_call.1} parent=1 // pred_check
      _
    $region39: #{tpu_custom_call.1} parent=1 // pred_check_branch
      %118 = sbr.rel (0) target = $region41
    $region40: #{tpu_custom_call.1} parent=1 // pred_region
      %120 = dma.done [#allocation4], 64
    $region41: #{tpu_custom_call.1} parent=1 // pred_fallthru
      _
    %121 = vsyncpa [#allocation3], 1
    %122 = vsyncpa [#allocation6], 1
    %123 = vsyncpa [#allocation9], 1
    %124 = vsyncpa [#allocation4], 1

</llo_original>
